<compile_context>
chip_gen: v7x
topology: tpu7x:2x2x1
jax: 0.10.0
libtpu: 0.0.40
codegen_flags: <defaults>
</compile_context>

<pallas_src>
import functools

import jax
import jax.numpy as jnp
from jax.experimental import pallas as pl
from jax.experimental.pallas import tpu as pltpu


# --------------------------------------------------------------------------
# helpers
# --------------------------------------------------------------------------
def _round_up(x, m):
    return (x + m - 1) // m * m


def _vmem_plan():
    """(vmem_limit_bytes, streamed-buffer budget) keyed off the chip's VMEM."""
    cap = None
    try:
        cap = getattr(pltpu.get_tpu_info(), "vmem_capacity_bytes", None)
    except Exception:
        cap = None
    if cap is None:
        cap = 64 * 1024 * 1024                      # be conservative (v7x-like)
    if cap >= 100 * 1024 * 1024:                    # v5e / v6e: 128 MiB physical
        return 64 * 1024 * 1024, 12 * 1024 * 1024
    return 32 * 1024 * 1024, 6 * 1024 * 1024        # v7x: 64 MiB physical


def _choose_k_tile(d_pad, batch, hidden, budget_bytes, n_buf=3):
    """Largest K tile (multiple of 128 dividing d_pad) whose streamed bf16
    buffers (x tile + one encoder's W1 tile, n_buf-deep) fit in budget_bytes.
    Counts VMEM tile padding: x pads its sublane dim (bf16 packs pairs, so
    batch rounds up to 16); the W1 tile pads its lane dim (hidden -> 128)."""
    bytes_per_k = n_buf * 2 * (_round_up(batch, 16) + _round_up(hidden, 128))
    tk = min(d_pad, max(128, (budget_bytes // bytes_per_k) // 128 * 128))
    while d_pad % tk != 0:      # d_pad is a multiple of 128, so this terminates
        tk -= 128
    return tk


def _stream_spec(block_shape, index_map, depth):
    """BlockSpec for a streamed operand with `depth`-deep buffering when the
    K grid is long enough; falls back to default double-buffering otherwise
    (or if this jax build lacks pipeline_mode/Buffered)."""
    if depth <= 2:
        return pl.BlockSpec(block_shape, index_map)
    try:
        return pl.BlockSpec(block_shape, index_map,
                            pipeline_mode=pl.Buffered(depth))
    except Exception:
        return pl.BlockSpec(block_shape, index_map)


# --------------------------------------------------------------------------
# fused forward kernel: grid = (encoder [parallel], K-tile [arbitrary])
# --------------------------------------------------------------------------
def _fused_encoder_kernel(x_ref, w1_ref, b1_ref, w2_ref, b2_ref, eps_ref,
                          out_ref, h_acc, *, z_dim):
    """One encoder, one K tile.

    x_ref   : (B, TK)     bf16   image K-tile
    w1_ref  : (TK, H)     bf16   this encoder's W1 K-tile
    b1_ref  : (1, H)      f32
    w2_ref  : (H, 2Z)     f32    [Wloc | Wscale] for this encoder
    b2_ref  : (1, 2Z)     f32    [bloc | bscale]
    eps_ref : (B, Z)      f32    this encoder's reparameterization noise
    out_ref : (B, 3Z)     f32    [loc | scale | z]
    h_acc   : (B, H)      f32    VMEM accumulator for hidden activations
    """
    k = pl.program_id(1)

    @pl.when(k == 0)
    def _():
        h_acc[...] = jnp.zeros_like(h_acc)

    # K-tiled first-stage matmul (bf16 stream, f32 accumulation).
    h_acc[...] += jnp.dot(x_ref[...], w1_ref[...],
                          preferred_element_type=jnp.float32)

    @pl.when(k == pl.num_programs(1) - 1)
    def _():
        h = jnp.maximum(h_acc[...] + b1_ref[...], 0.0)                 # ReLU
        t = jnp.dot(h, w2_ref[...],
                    preferred_element_type=jnp.float32) + b2_ref[...]  # (B, 2Z)
        loc = t[:, :z_dim]
        scale = jax.nn.softplus(t[:, z_dim:]) + 1e-6                   # > 0
        z = loc + scale * eps_ref[...]                                 # rsample
        # Direct slice stores (no jnp.concatenate shuffle in the epilogue).
        out_ref[:, 0:z_dim] = loc
        out_ref[:, z_dim:2 * z_dim] = scale
        out_ref[:, 2 * z_dim:3 * z_dim] = z


def _xyd_encode_fused(x_bf16, w1, b1, w2, b2, eps, *, z_dim, hidden):
    """x_bf16: (B, Dpad) bf16; w1: (3, Dpad, H) bf16; w2: (3, H, 2Z) f32;
    eps: (3, B, Z) f32.  Returns (3, B, 3Z) f32 = per-encoder [loc|scale|z]."""
    b, d_pad = x_bf16.shape
    n_enc = w1.shape[0]
    z3 = 3 * z_dim

    vmem_limit, stream_budget = _vmem_plan()
    tk = _choose_k_tile(d_pad, b, hidden, stream_budget)
    num_k = d_pad // tk
    depth = 3 if num_k >= 3 else 2      # deeper buffering only when useful

    kernel = functools.partial(_fused_encoder_kernel, z_dim=z_dim)
    return pl.pallas_call(
        kernel,
        out_shape=jax.ShapeDtypeStruct((n_enc, b, z3), jnp.float32),
        grid_spec=pltpu.PrefetchScalarGridSpec(
            num_scalar_prefetch=0,
            grid=(n_enc, num_k),
            in_specs=[
                _stream_spec((b, tk), lambda e, k: (0, k), depth),              # x
                _stream_spec((None, tk, hidden), lambda e, k: (e, k, 0), depth),  # W1[e]
                pl.BlockSpec((None, 1, hidden), lambda e, k: (e, 0, 0)),        # b1[e]
                pl.BlockSpec((None, hidden, 2 * z_dim), lambda e, k: (e, 0, 0)),  # W2[e]
                pl.BlockSpec((None, 1, 2 * z_dim), lambda e, k: (e, 0, 0)),     # b2[e]
                pl.BlockSpec((None, b, z_dim), lambda e, k: (e, 0, 0)),         # eps[e]
            ],
            out_specs=pl.BlockSpec((None, b, z3), lambda e, k: (e, 0, 0)),
            scratch_shapes=[pltpu.VMEM((b, hidden), jnp.float32)],
        ),
        compiler_params=pltpu.CompilerParams(
            dimension_semantics=("parallel", "arbitrary"),   # encoders across TCs
            vmem_limit_bytes=vmem_limit,
        ),
    )(x_bf16, w1, b1, w2, b2, eps)


# --------------------------------------------------------------------------
# loc-only fast path for infer_zy_loc: streams only W1[zy], loc head only
# --------------------------------------------------------------------------
def _zy_loc_kernel(x_ref, w1_ref, b1_ref, wloc_ref, bloc_ref, out_ref, h_acc):
    k = pl.program_id(0)

    @pl.when(k == 0)
    def _():
        h_acc[...] = jnp.zeros_like(h_acc)

    h_acc[...] += jnp.dot(x_ref[...], w1_ref[...],
                          preferred_element_type=jnp.float32)

    @pl.when(k == pl.num_programs(0) - 1)
    def _():
        h = jnp.maximum(h_acc[...] + b1_ref[...], 0.0)
        out_ref[...] = jnp.dot(h, wloc_ref[...],
                               preferred_element_type=jnp.float32) + bloc_ref[...]


def _zy_loc_only(x_bf16, w1, b1, wloc, bloc, *, z_dim, hidden):
    b, d_pad = x_bf16.shape
    vmem_limit, stream_budget = _vmem_plan()
    tk = _choose_k_tile(d_pad, b, hidden, stream_budget)
    num_k = d_pad // tk
    depth = 3 if num_k >= 3 else 2

    return pl.pallas_call(
        _zy_loc_kernel,
        out_shape=jax.ShapeDtypeStruct((b, z_dim), jnp.float32),
        grid_spec=pltpu.PrefetchScalarGridSpec(
            num_scalar_prefetch=0,
            grid=(num_k,),
            in_specs=[
                _stream_spec((b, tk), lambda k: (0, k), depth),             # x
                _stream_spec((None, tk, hidden), lambda k: (2, k, 0), depth),  # W1[zy]
                pl.BlockSpec((None, 1, hidden), lambda k: (2, 0, 0)),       # b1[zy]
                pl.BlockSpec((hidden, z_dim), lambda k: (0, 0)),            # Wloc[zy]
                pl.BlockSpec((1, z_dim), lambda k: (0, 0)),                 # bloc[zy]
            ],
            out_specs=pl.BlockSpec((b, z_dim), lambda k: (0, 0)),
            scratch_shapes=[pltpu.VMEM((b, hidden), jnp.float32)],
        ),
        compiler_params=pltpu.CompilerParams(
            dimension_semantics=("arbitrary",),
            vmem_limit_bytes=vmem_limit,
        ),
    )(x_bf16, w1, b1, wloc, bloc)


# --------------------------------------------------------------------------
# module wrapper
# --------------------------------------------------------------------------
class XYDEncoderParallelPallas:
    """JAX/Pallas port of XYDEncoderParallel.forward.

    forward(img) -> (q_zd, zd_q, q_zx, zx_q, q_zy, zy_q)
    where each q_* is a (loc, scale) tuple standing in for torch Normal."""

    def __init__(self, img_shape, hidden=32, z_dim=8, key=jax.random.PRNGKey(0)):
        c, hi, wi = img_shape
        d = c * hi * wi
        self.d = d
        self.d_pad = _round_up(d, 128)          # pad flattened-image dim for K tiling
        self.z_dim = z_dim
        self.hidden = hidden

        ks = jax.random.split(key, 7)
        s1 = 1.0 / jnp.sqrt(d)
        s2 = 1.0 / jnp.sqrt(hidden)
        # Independent per-encoder parameters (order: zd, zx, zy).
        w1 = jax.random.normal(ks[0], (3, d, hidden), jnp.float32) * s1
        b1 = jax.random.normal(ks[1], (3, hidden), jnp.float32) * 0.01
        wloc = jax.random.normal(ks[2], (3, hidden, z_dim), jnp.float32) * s2
        bloc = jax.random.normal(ks[3], (3, z_dim), jnp.float32) * 0.01
        wsc = jax.random.normal(ks[4], (3, hidden, z_dim), jnp.float32) * s2
        bsc = jax.random.normal(ks[5], (3, z_dim), jnp.float32) * 0.01
        self._eps_key = ks[6]

        # ---- packed parameterization used by the kernels ----
        # W1 kept per-encoder (3, Dpad, H), zero-padded on D, streamed in bf16.
        # TODO(synk): store W1 as int8 (v5e/v6e) / fp8-e4m3 (v7x) with
        # per-column scales to halve the dominant HBM stream if accuracy allows.
        w1p = jnp.zeros((3, self.d_pad, hidden), jnp.float32).at[:, :d, :].set(w1)
        self.w1 = w1p.astype(jnp.bfloat16)
        self.b1 = b1[:, None, :]                                    # (3, 1, H)
        self.w2 = jnp.concatenate([wloc, wsc], axis=-1)             # (3, H, 2Z)
        self.b2 = jnp.concatenate([bloc, bsc], axis=-1)[:, None, :]  # (3, 1, 2Z)

    def _flatten_pad(self, img):
        b = img.shape[0]
        x = img.reshape(b, -1)                                      # torch .view(B, -1)
        return jnp.pad(x, ((0, 0), (0, self.d_pad - self.d))).astype(jnp.bfloat16)

    def forward(self, img, key=None):
        b = img.shape[0]
        x = self._flatten_pad(img)
        if key is None:
            # Fresh noise per call, like torch rsample().
            self._eps_key, key = jax.random.split(self._eps_key)
        # TODO(synk): generate eps in-kernel via pltpu.prng_seed +
        # pltpu.stateful_normal (seed via scalar prefetch) to drop this DMA.
        eps = jax.random.normal(key, (3, b, self.z_dim), jnp.float32)

        out = _xyd_encode_fused(x, self.w1, self.b1, self.w2, self.b2, eps,
                                z_dim=self.z_dim, hidden=self.hidden)
        z = self.z_dim
        packs = []
        for e in range(3):           # 0=zd, 1=zx, 2=zy
            loc = out[e, :, :z]
            scale = out[e, :, z:2 * z]
            smp = out[e, :, 2 * z:3 * z]
            packs.append(((loc, scale), smp))
        (q_zd, zd_q), (q_zx, zx_q), (q_zy, zy_q) = packs
        return q_zd, zd_q, q_zx, zx_q, q_zy, zy_q

    def infer_zy_loc(self, img):
        """Return the mean (loc) of q_zy; streams only the zy encoder's W1."""
        x = self._flatten_pad(img)
        wloc = self.w2[2, :, :self.z_dim]        # (H, Z)
        bloc = self.b2[2, :, :self.z_dim]        # (1, Z)
        return _zy_loc_only(x, self.w1, self.b1, wloc, bloc,
                            z_dim=self.z_dim, hidden=self.hidden)


# --------------------------------------------------------------------------
# demo / self-test
# --------------------------------------------------------------------------
if __name__ == "__main__":
    B, C, Hi, Wi = 2, 4, 16, 16
    hidden, z_dim = 32, 8

    k_img, k_eps = jax.random.split(jax.random.PRNGKey(0))
    img = jax.random.normal(k_img, (B, C, Hi, Wi), jnp.float32)

    enc = XYDEncoderParallelPallas((C, Hi, Wi), hidden=hidden, z_dim=z_dim,
                                   key=jax.random.PRNGKey(0))

    q_zd, zd_q, q_zx, zx_q, q_zy, zy_q = enc.forward(img, key=k_eps)
    jax.block_until_ready((q_zd, zd_q, q_zx, zx_q, q_zy, zy_q))

    zy_loc = enc.infer_zy_loc(img)
    jax.block_until_ready(zy_loc)

    # ---- pure-JAX reference (same bf16-rounded streamed operands) ----
    x_ref = jnp.pad(img.reshape(B, -1), ((0, 0), (0, enc.d_pad - enc.d)))
    x_ref = x_ref.astype(jnp.bfloat16).astype(jnp.float32)
    w1_f = enc.w1.astype(jnp.float32)
    eps = jax.random.normal(k_eps, (3, B, z_dim), jnp.float32)
    refs = []
    for e in range(3):
        h = jnp.maximum(x_ref @ w1_f[e] + enc.b1[e], 0.0)
        t = h @ enc.w2[e] + enc.b2[e]
        loc = t[:, :z_dim]
        scale = jax.nn.softplus(t[:, z_dim:]) + 1e-6
        refs.append((loc, scale, loc + scale * eps[e]))

    got = [(q_zd[0], q_zd[1], zd_q),
           (q_zx[0], q_zx[1], zx_q),
           (q_zy[0], q_zy[1], zy_q)]
    for (rl, rs, rz), (gl, gs, gz) in zip(refs, got):
        assert bool(jnp.allclose(gl, rl, rtol=2e-2, atol=2e-2))
        assert bool(jnp.allclose(gs, rs, rtol=2e-2, atol=2e-2))
        assert bool(jnp.allclose(gz, rz, rtol=2e-2, atol=2e-2))
    assert bool(jnp.allclose(zy_loc, refs[2][0], rtol=2e-2, atol=2e-2))

    # sanity checks
    assert zd_q.shape == (B, z_dim) and zx_q.shape == (B, z_dim) and zy_q.shape == (B, z_dim)
    assert q_zd[0].shape == (B, z_dim) and q_zd[1].shape == (B, z_dim)
    assert bool(jnp.all(q_zd[1] > 0)) and bool(jnp.all(q_zx[1] > 0)) and bool(jnp.all(q_zy[1] > 0))
    assert zy_loc.shape == (B, z_dim)
    assert bool(jnp.all(jnp.isfinite(zd_q))) and bool(jnp.all(jnp.isfinite(zy_loc)))

    print("KERNEL_OK")
</pallas_src>

<mosaic_0001>
module attributes {stable_mosaic.version = 11 : i64} {
  func.func @_fused_encoder_kernel(%arg0: i32, %arg1: i32, %arg2: memref<2x1024xbf16, #tpu.memory_space<vmem>>, %arg3: memref<1x1024x32xbf16, #tpu.memory_space<vmem>>, %arg4: memref<1x1x32xf32, #tpu.memory_space<vmem>>, %arg5: memref<1x32x16xf32, #tpu.memory_space<vmem>>, %arg6: memref<1x1x16xf32, #tpu.memory_space<vmem>>, %arg7: memref<1x2x8xf32, #tpu.memory_space<vmem>>, %arg8: memref<1x2x24xf32, #tpu.memory_space<vmem>>, %arg9: memref<2x32xf32, #tpu.memory_space<vmem>>) attributes {dimension_semantics = [#tpu.dimension_semantics<parallel>, #tpu.dimension_semantics<arbitrary>], iteration_bounds = array<i64: 3, 1>, scalar_prefetch = 0 : i64, scratch_operands = 1 : i64, tpu.core_type = #tpu.core_type<tc>, window_params = [{transform_indices = @transform_0, window_bounds = array<i64: 2, 1024>}, {transform_indices = @transform_1, window_bounds = array<i64: 1, 1024, 32>}, {transform_indices = @transform_2, window_bounds = array<i64: 1, 1, 32>}, {transform_indices = @transform_3, window_bounds = array<i64: 1, 32, 16>}, {transform_indices = @transform_4, window_bounds = array<i64: 1, 1, 16>}, {transform_indices = @transform_5, window_bounds = array<i64: 1, 2, 8>}, {transform_indices = @transform_6, window_bounds = array<i64: 1, 2, 24>}]} {
    %c0_i32 = arith.constant 0 : i32
    %0 = arith.cmpi eq, %arg1, %c0_i32 : i32
    %1 = arith.extui %0 : i1 to i32
    %c0_i32_0 = arith.constant 0 : i32
    %2 = arith.cmpi ne, %1, %c0_i32_0 : i32
    scf.if %2 {
      %cst_11 = arith.constant 0.000000e+00 : f32
      %13 = vector.broadcast %cst_11 : f32 to vector<2x32xf32>
      %c0_12 = arith.constant 0 : index
      %c0_13 = arith.constant 0 : index
      %14 = vector.load %arg9[%c0_12, %c0_13] : memref<2x32xf32, #tpu.memory_space<vmem>>, vector<2x32xf32>
      tpu.vector_store %arg9[%c0_12, %c0_13], %13 {strides = array<i32>} : memref<2x32xf32, #tpu.memory_space<vmem>>, vector<2x32xf32>,
    } else {
    }
    %c0 = arith.constant 0 : index
    %c0_1 = arith.constant 0 : index
    %3 = vector.load %arg9[%c0, %c0_1] : memref<2x32xf32, #tpu.memory_space<vmem>>, vector<2x32xf32>
    %c0_2 = arith.constant 0 : index
    %c0_3 = arith.constant 0 : index
    %4 = vector.load %arg2[%c0_2, %c0_3] : memref<2x1024xbf16, #tpu.memory_space<vmem>>, vector<2x1024xbf16>
    %c0_4 = arith.constant 0 : index
    %c0_5 = arith.constant 0 : index
    %c0_6 = arith.constant 0 : index
    %5 = vector.load %arg3[%c0_4, %c0_5, %c0_6] : memref<1x1024x32xbf16, #tpu.memory_space<vmem>>, vector<1x1024x32xbf16>
    %6 = vector.shape_cast %5 : vector<1x1024x32xbf16> to vector<1024x32xbf16>
    %cst = arith.constant dense<0.000000e+00> : vector<2x32xf32>
    %7 = tpu.matmul %4, %6, %cst {dimension_numbers = #tpu.dot_dimension_numbers<[1], [0], [0], [1], [0, 0, 1, 1], [], []>} : vector<2x1024xbf16>, vector<1024x32xbf16>, vector<2x32xf32> -> vector<2x32xf32>
    %8 = arith.addf %3, %7 : vector<2x32xf32>
    %c0_7 = arith.constant 0 : index
    %c0_8 = arith.constant 0 : index
    %9 = vector.load %arg9[%c0_7, %c0_8] : memref<2x32xf32, #tpu.memory_space<vmem>>, vector<2x32xf32>
    tpu.vector_store %arg9[%c0_7, %c0_8], %8 {strides = array<i32>} : memref<2x32xf32, #tpu.memory_space<vmem>>, vector<2x32xf32>,
    %c0_i32_9 = arith.constant 0 : i32
    %10 = arith.cmpi eq, %arg1, %c0_i32_9 : i32
    %11 = arith.extui %10 : i1 to i32
    %c0_i32_10 = arith.constant 0 : i32
    %12 = arith.cmpi ne, %11, %c0_i32_10 : i32
    scf.if %12 {
      %c0_11 = arith.constant 0 : index
      %c0_12 = arith.constant 0 : index
      %13 = vector.load %arg9[%c0_11, %c0_12] : memref<2x32xf32, #tpu.memory_space<vmem>>, vector<2x32xf32>
      %c0_13 = arith.constant 0 : index
      %c0_14 = arith.constant 0 : index
      %c0_15 = arith.constant 0 : index
      %14 = vector.load %arg4[%c0_13, %c0_14, %c0_15] : memref<1x1x32xf32, #tpu.memory_space<vmem>>, vector<1x1x32xf32>
      %15 = vector.shape_cast %14 : vector<1x1x32xf32> to vector<1x32xf32>
      %16 = vector.broadcast %15 : vector<1x32xf32> to vector<2x32xf32>
      %17 = arith.addf %13, %16 : vector<2x32xf32>
      %cst_16 = arith.constant 0.000000e+00 : f32
      %18 = vector.broadcast %cst_16 : f32 to vector<2x32xf32>
      %19 = arith.maximumf %17, %18 : vector<2x32xf32>
      %c0_17 = arith.constant 0 : index
      %c0_18 = arith.constant 0 : index
      %c0_19 = arith.constant 0 : index
      %20 = vector.load %arg5[%c0_17, %c0_18, %c0_19] : memref<1x32x16xf32, #tpu.memory_space<vmem>>, vector<1x32x16xf32>
      %21 = vector.shape_cast %20 : vector<1x32x16xf32> to vector<32x16xf32>
      %cst_20 = arith.constant dense<0.000000e+00> : vector<2x16xf32>
      %22 = tpu.matmul %19, %21, %cst_20 {dimension_numbers = #tpu.dot_dimension_numbers<[1], [0], [0], [1], [0, 0, 1, 1], [], []>} : vector<2x32xf32>, vector<32x16xf32>, vector<2x16xf32> -> vector<2x16xf32>
      %c0_21 = arith.constant 0 : index
      %c0_22 = arith.constant 0 : index
      %c0_23 = arith.constant 0 : index
      %23 = vector.load %arg6[%c0_21, %c0_22, %c0_23] : memref<1x1x16xf32, #tpu.memory_space<vmem>>, vector<1x1x16xf32>
      %24 = vector.shape_cast %23 : vector<1x1x16xf32> to vector<1x16xf32>
      %25 = vector.broadcast %24 : vector<1x16xf32> to vector<2x16xf32>
      %26 = arith.addf %22, %25 : vector<2x16xf32>
      %27 = vector.extract_strided_slice %26 {offsets = [0, 0], sizes = [2, 8], strides = [1, 1]} : vector<2x16xf32> to vector<2x8xf32>
      %28 = vector.extract_strided_slice %26 {offsets = [0, 8], sizes = [2, 8], strides = [1, 1]} : vector<2x16xf32> to vector<2x8xf32>
      %cst_24 = arith.constant 0.000000e+00 : f32
      %29 = vector.broadcast %cst_24 : f32 to vector<2x8xf32>
      %30 = arith.maximumf %28, %29 : vector<2x8xf32>
      %31 = vector.broadcast %cst_24 : f32 to vector<2x8xf32>
      %32 = arith.subf %28, %31 : vector<2x8xf32>
      %33 = arith.cmpf one, %32, %32 : vector<2x8xf32>
      %34 = vector.broadcast %cst_24 : f32 to vector<2x8xf32>
      %35 = arith.addf %28, %34 : vector<2x8xf32>
      %36 = math.absf %32 : vector<2x8xf32>
      %cst_25 = arith.constant 0.000000e+00 : f32
      %37 = vector.broadcast %cst_25 : f32 to vector<2x8xf32>
      %38 = arith.subf %37, %36 : vector<2x8xf32>
      %39 = math.exp %38 : vector<2x8xf32>
      %40 = math.log1p %39 : vector<2x8xf32>
      %41 = arith.addf %30, %40 : vector<2x8xf32>
      %42 = arith.select %33, %35, %41 : vector<2x8xi1>, vector<2x8xf32>
      %cst_26 = arith.constant 9.99999997E-7 : f32
      %43 = vector.broadcast %cst_26 : f32 to vector<2x8xf32>
      %44 = arith.addf %42, %43 : vector<2x8xf32>
      %c0_27 = arith.constant 0 : index
      %c0_28 = arith.constant 0 : index
      %c0_29 = arith.constant 0 : index
      %45 = vector.load %arg7[%c0_27, %c0_28, %c0_29] : memref<1x2x8xf32, #tpu.memory_space<vmem>>, vector<1x2x8xf32>
      %46 = vector.shape_cast %45 : vector<1x2x8xf32> to vector<2x8xf32>
      %47 = arith.mulf %44, %46 : vector<2x8xf32>
      %48 = arith.addf %27, %47 : vector<2x8xf32>
      %c0_30 = arith.constant 0 : index
      %c0_31 = arith.constant 0 : index
      %c0_32 = arith.constant 0 : index
      %49 = vector.load %arg8[%c0_30, %c0_31, %c0_32] : memref<1x2x24xf32, #tpu.memory_space<vmem>>, vector<1x2x8xf32>
      %50 = vector.shape_cast %49 : vector<1x2x8xf32> to vector<2x8xf32>
      %51 = vector.shape_cast %27 : vector<2x8xf32> to vector<1x2x8xf32>
      tpu.vector_store %arg8[%c0_30, %c0_31, %c0_32], %51 {strides = array<i32>} : memref<1x2x24xf32, #tpu.memory_space<vmem>>, vector<1x2x8xf32>,
      %c0_33 = arith.constant 0 : index
      %c0_34 = arith.constant 0 : index
      %c8 = arith.constant 8 : index
      %52 = vector.load %arg8[%c0_33, %c0_34, %c8] : memref<1x2x24xf32, #tpu.memory_space<vmem>>, vector<1x2x8xf32>
      %53 = vector.shape_cast %52 : vector<1x2x8xf32> to vector<2x8xf32>
      %54 = vector.shape_cast %44 : vector<2x8xf32> to vector<1x2x8xf32>
      tpu.vector_store %arg8[%c0_33, %c0_34, %c8], %54 {strides = array<i32>} : memref<1x2x24xf32, #tpu.memory_space<vmem>>, vector<1x2x8xf32>,
      %c0_35 = arith.constant 0 : index
      %c0_36 = arith.constant 0 : index
      %c16 = arith.constant 16 : index
      %55 = vector.load %arg8[%c0_35, %c0_36, %c16] : memref<1x2x24xf32, #tpu.memory_space<vmem>>, vector<1x2x8xf32>
      %56 = vector.shape_cast %55 : vector<1x2x8xf32> to vector<2x8xf32>
      %57 = vector.shape_cast %48 : vector<2x8xf32> to vector<1x2x8xf32>
      tpu.vector_store %arg8[%c0_35, %c0_36, %c16], %57 {strides = array<i32>} : memref<1x2x24xf32, #tpu.memory_space<vmem>>, vector<1x2x8xf32>,
    } else {
    }
    return
  }
  func.func @transform_0(%arg0: i32, %arg1: i32) -> (i32, i32) {
    %c0_i32 = arith.constant 0 : i32
    %c0_i32_0 = arith.constant 0 : i32
    return %c0_i32, %arg1 : i32, i32
  }
  func.func @transform_1(%arg0: i32, %arg1: i32) -> (i32, i32, i32) {
    %c0_i32 = arith.constant 0 : i32
    %c0_i32_0 = arith.constant 0 : i32
    return %arg0, %arg1, %c0_i32 : i32, i32, i32
  }
  func.func @transform_2(%arg0: i32, %arg1: i32) -> (i32, i32, i32) {
    %c0_i32 = arith.constant 0 : i32
    %c0_i32_0 = arith.constant 0 : i32
    %c0_i32_1 = arith.constant 0 : i32
    return %arg0, %c0_i32, %c0_i32_0 : i32, i32, i32
  }
  func.func @transform_3(%arg0: i32, %arg1: i32) -> (i32, i32, i32) {
    %c0_i32 = arith.constant 0 : i32
    %c0_i32_0 = arith.constant 0 : i32
    %c0_i32_1 = arith.constant 0 : i32
    return %arg0, %c0_i32, %c0_i32_0 : i32, i32, i32
  }
  func.func @transform_4(%arg0: i32, %arg1: i32) -> (i32, i32, i32) {
    %c0_i32 = arith.constant 0 : i32
    %c0_i32_0 = arith.constant 0 : i32
    %c0_i32_1 = arith.constant 0 : i32
    return %arg0, %c0_i32, %c0_i32_0 : i32, i32, i32
  }
  func.func @transform_5(%arg0: i32, %arg1: i32) -> (i32, i32, i32) {
    %c0_i32 = arith.constant 0 : i32
    %c0_i32_0 = arith.constant 0 : i32
    %c0_i32_1 = arith.constant 0 : i32
    return %arg0, %c0_i32, %c0_i32_0 : i32, i32, i32
  }
  func.func @transform_6(%arg0: i32, %arg1: i32) -> (i32, i32, i32) {
    %c0_i32 = arith.constant 0 : i32
    %c0_i32_0 = arith.constant 0 : i32
    %c0_i32_1 = arith.constant 0 : i32
    return %arg0, %c0_i32, %c0_i32_0 : i32, i32, i32
  }
}

</mosaic_0001>

<llo_original>
// kernel: tpu_custom_call.1
$region0: #{tpu_custom_call.1}
  #allocation0 [shape = 'u32[]', space=smem, size = 0x4, offset = 0x4, fixed_abs, tag = 'smem constant byte address 0x4 - core index']
  #allocation1 [shape = 'u32[144,128]{1,0:T(1,128)}', space=vmem, size = 0x12000, scoped, tag = 'internal scratch']
  #allocation2 [shape = 'f32[2,32]{1,0:T(2,128)}', space=vmem, size = 0x400, scoped, tag = 'scratch operand']
  %s0 = inlined_call_operand.vmem [shape: bf16[2,1024], index: 0, kind: input, shape index: {}]
  %s1 = inlined_call_operand.vmem [shape: bf16[3,1024,32], index: 1, kind: input, shape index: {}]
  %s2 = inlined_call_operand.vmem [shape: f32[3,1,32], index: 2, kind: input, shape index: {}]
  %s3 = inlined_call_operand.vmem [shape: f32[3,32,16], index: 3, kind: input, shape index: {}]
  %s4 = inlined_call_operand.vmem [shape: f32[3,1,16], index: 4, kind: input, shape index: {}]
  %s5 = inlined_call_operand.vmem [shape: f32[3,2,8], index: 5, kind: input, shape index: {}]
  %s6 = inlined_call_operand.hbm [shape: f32[3,2,24], index: 6, kind: output, shape index: {}]
  %s7 = sld [smem:[#allocation0]]
  $region65: #{tpu_custom_call.1} parent=0
    _
  %s9 = ssub.s32 1, %s7
  %s10 = scalar_select 0, %s9, %s7
  $region1: #{tpu_custom_call.1} parent=0
    #allocation3 [shape = 'u8[2048]{0}', space=vmem, size = 0x800, scoped, tag = 'output window, operand 0']
    #allocation4 [shape = 's32[2]{0}', space=sflag, size = 0x8, scoped, tag = 'scoped memory for tpu_custom_call.1']
    %11 = vsyncpa [#allocation4], 0
    %s12 = scalar_lea.sflag [#allocation4], 1
    %13 = vsyncpa %s12, 0
    loop: start=0, step=1, limit=5
    $region2: #{tpu_custom_call.1} parent=1 // loop_pre_header
      _
    $region3: #{tpu_custom_call.1} parent=1 // loop_header
      %s15 = sphi 0, %s19
      %p16 = scmp.ge.s32.totalorder %s15, 5
      %s22 = sphi 0, %s34
      %s23 = sphi 0, %s30
      %s24 = sphi 0, %s22
      %s25 = sphi 0, %s23
      %s26 = sphi 0, %s24
      %s27 = sphi 0, %s25
      %s37 = sphi 0, %s39
      %s40 = sphi 0, %s37
      %s41 = sphi 0, %s40
      %s57 = sphi 0, %s41
      %s65 = sphi 0, %s67
      %s68 = sphi 0, %s65
      %s69 = sphi 0, %s68
      %s85 = sphi 0, %s69
      %s91 = sphi 0, %s93
      %s94 = sphi 0, %s91
      %s95 = sphi 0, %s94
      %s111 = sphi 0, %s95
      %s117 = sphi 0, %s119
      %s120 = sphi 0, %s117
      %s121 = sphi 0, %s120
      %s137 = sphi 0, %s121
      %s143 = sphi 0, %s145
      %s146 = sphi 0, %s143
      %s147 = sphi 0, %s146
      %s163 = sphi 0, %s147
      %s169 = sphi 0, %s171
      %s172 = sphi 0, %s169
      %s173 = sphi 0, %s172
      %s189 = sphi 0, %s173
      %s195 = sphi 0, %s197
      %s198 = sphi 0, %s195
      %s199 = sphi 0, %s198
      %s215 = sphi 0, %s199
    $region4: #{tpu_custom_call.1} parent=1 // loop_header_branch
      %18 = sbr.rel (%p16) target = $region8
    $region5: #{tpu_custom_call.1} parent=1 // loop_body
      %s20 = ssub.s32 %s15, 1
      %s21 = ssub.s32 %s15, 2
      %s28 = sadd.s32 1, %s23
      %p29 = scmp.ge.s32.totalorder %s28, 1
      %s30 = scalar_select %p29, 0, %s28
      %s31 = sadd.s32 1, %s22
      %s32 = scalar_select %p29, %s31, %s22
      %p33 = scmp.ge.s32.totalorder %s32, 3
      %s34 = scalar_select %p33, 0, %s32
      %s35 = ssub.s32 %s23, %s30
      %p36 = scmp.eq.s32.totalorder %s35, 0
      %s38 = sadd.s32 %s37, 1
      %s39 = scalar_select %p36, %s37, %s38
      %p42 = pneg %p36
      %p43 = scmp.eq.s32.totalorder %s15, 2
      %p44 = por %p42, %p43
      %p45 = scmp.ne.s32.totalorder %s37, %s40
      %p46 = scmp.eq.s32.totalorder %s15, 0
      %p47 = por %p45, %p46
      %p48 = scmp.ne.s32.totalorder %s37, %s40
      %p49 = scmp.eq.s32.totalorder %s20, 2
      %p50 = por %p48, %p49
      %p51 = scmp.ne.s32.totalorder %s40, %s41
      %p52 = scmp.eq.s32.totalorder %s20, 0
      %p53 = por %p51, %p52
      %p54 = scmp.ne.s32.totalorder %s40, %s41
      %p55 = scmp.eq.s32.totalorder %s21, 2
      %p56 = por %p54, %p55
      %p58 = scmp.ne.s32.totalorder %s41, %s57
      %p59 = scmp.eq.s32.totalorder %s21, 0
      %p60 = por %p58, %p59
      %s61 = ssub.s32 %s22, %s34
      %s62 = ssub.s32 %s23, %s30
      %s63 = sor.u32 %s61, %s62
      %p64 = scmp.eq.s32.totalorder %s63, 0
      %s66 = sadd.s32 %s65, 1
      %s67 = scalar_select %p64, %s65, %s66
      %p70 = pneg %p64
      %p71 = scmp.eq.s32.totalorder %s15, 2
      %p72 = por %p70, %p71
      %p73 = scmp.ne.s32.totalorder %s65, %s68
      %p74 = scmp.eq.s32.totalorder %s15, 0
      %p75 = por %p73, %p74
      %p76 = scmp.ne.s32.totalorder %s65, %s68
      %p77 = scmp.eq.s32.totalorder %s20, 2
      %p78 = por %p76, %p77
      %p79 = scmp.ne.s32.totalorder %s68, %s69
      %p80 = scmp.eq.s32.totalorder %s20, 0
      %p81 = por %p79, %p80
      %p82 = scmp.ne.s32.totalorder %s68, %s69
      %p83 = scmp.eq.s32.totalorder %s21, 2
      %p84 = por %p82, %p83
      %p86 = scmp.ne.s32.totalorder %s69, %s85
      %p87 = scmp.eq.s32.totalorder %s21, 0
      %p88 = por %p86, %p87
      %s89 = ssub.s32 %s22, %s34
      %p90 = scmp.eq.s32.totalorder %s89, 0
      %s92 = sadd.s32 %s91, 1
      %s93 = scalar_select %p90, %s91, %s92
      %p96 = pneg %p90
      %p97 = scmp.eq.s32.totalorder %s15, 2
      %p98 = por %p96, %p97
      %p99 = scmp.ne.s32.totalorder %s91, %s94
      %p100 = scmp.eq.s32.totalorder %s15, 0
      %p101 = por %p99, %p100
      %p102 = scmp.ne.s32.totalorder %s91, %s94
      %p103 = scmp.eq.s32.totalorder %s20, 2
      %p104 = por %p102, %p103
      %p105 = scmp.ne.s32.totalorder %s94, %s95
      %p106 = scmp.eq.s32.totalorder %s20, 0
      %p107 = por %p105, %p106
      %p108 = scmp.ne.s32.totalorder %s94, %s95
      %p109 = scmp.eq.s32.totalorder %s21, 2
      %p110 = por %p108, %p109
      %p112 = scmp.ne.s32.totalorder %s95, %s111
      %p113 = scmp.eq.s32.totalorder %s21, 0
      %p114 = por %p112, %p113
      %s115 = ssub.s32 %s22, %s34
      %p116 = scmp.eq.s32.totalorder %s115, 0
      %s118 = sadd.s32 %s117, 1
      %s119 = scalar_select %p116, %s117, %s118
      %p122 = pneg %p116
      %p123 = scmp.eq.s32.totalorder %s15, 2
      %p124 = por %p122, %p123
      %p125 = scmp.ne.s32.totalorder %s117, %s120
      %p126 = scmp.eq.s32.totalorder %s15, 0
      %p127 = por %p125, %p126
      %p128 = scmp.ne.s32.totalorder %s117, %s120
      %p129 = scmp.eq.s32.totalorder %s20, 2
      %p130 = por %p128, %p129
      %p131 = scmp.ne.s32.totalorder %s120, %s121
      %p132 = scmp.eq.s32.totalorder %s20, 0
      %p133 = por %p131, %p132
      %p134 = scmp.ne.s32.totalorder %s120, %s121
      %p135 = scmp.eq.s32.totalorder %s21, 2
      %p136 = por %p134, %p135
      %p138 = scmp.ne.s32.totalorder %s121, %s137
      %p139 = scmp.eq.s32.totalorder %s21, 0
      %p140 = por %p138, %p139
      %s141 = ssub.s32 %s22, %s34
      %p142 = scmp.eq.s32.totalorder %s141, 0
      %s144 = sadd.s32 %s143, 1
      %s145 = scalar_select %p142, %s143, %s144
      %p148 = pneg %p142
      %p149 = scmp.eq.s32.totalorder %s15, 2
      %p150 = por %p148, %p149
      %p151 = scmp.ne.s32.totalorder %s143, %s146
      %p152 = scmp.eq.s32.totalorder %s15, 0
      %p153 = por %p151, %p152
      %p154 = scmp.ne.s32.totalorder %s143, %s146
      %p155 = scmp.eq.s32.totalorder %s20, 2
      %p156 = por %p154, %p155
      %p157 = scmp.ne.s32.totalorder %s146, %s147
      %p158 = scmp.eq.s32.totalorder %s20, 0
      %p159 = por %p157, %p158
      %p160 = scmp.ne.s32.totalorder %s146, %s147
      %p161 = scmp.eq.s32.totalorder %s21, 2
      %p162 = por %p160, %p161
      %p164 = scmp.ne.s32.totalorder %s147, %s163
      %p165 = scmp.eq.s32.totalorder %s21, 0
      %p166 = por %p164, %p165
      %s167 = ssub.s32 %s22, %s34
      %p168 = scmp.eq.s32.totalorder %s167, 0
      %s170 = sadd.s32 %s169, 1
      %s171 = scalar_select %p168, %s169, %s170
      %p174 = pneg %p168
      %p175 = scmp.eq.s32.totalorder %s15, 2
      %p176 = por %p174, %p175
      %p177 = scmp.ne.s32.totalorder %s169, %s172
      %p178 = scmp.eq.s32.totalorder %s15, 0
      %p179 = por %p177, %p178
      %p180 = scmp.ne.s32.totalorder %s169, %s172
      %p181 = scmp.eq.s32.totalorder %s20, 2
      %p182 = por %p180, %p181
      %p183 = scmp.ne.s32.totalorder %s172, %s173
      %p184 = scmp.eq.s32.totalorder %s20, 0
      %p185 = por %p183, %p184
      %p186 = scmp.ne.s32.totalorder %s172, %s173
      %p187 = scmp.eq.s32.totalorder %s21, 2
      %p188 = por %p186, %p187
      %p190 = scmp.ne.s32.totalorder %s173, %s189
      %p191 = scmp.eq.s32.totalorder %s21, 0
      %p192 = por %p190, %p191
      %s193 = ssub.s32 %s22, %s34
      %p194 = scmp.eq.s32.totalorder %s193, 0
      %s196 = sadd.s32 %s195, 1
      %s197 = scalar_select %p194, %s195, %s196
      %p200 = pneg %p194
      %p201 = scmp.eq.s32.totalorder %s15, 2
      %p202 = por %p200, %p201
      %p203 = scmp.ne.s32.totalorder %s195, %s198
      %p204 = scmp.eq.s32.totalorder %s15, 0
      %p205 = por %p203, %p204
      %p206 = scmp.ne.s32.totalorder %s195, %s198
      %p207 = scmp.eq.s32.totalorder %s20, 2
      %p208 = por %p206, %p207
      %p209 = scmp.ne.s32.totalorder %s198, %s199
      %p210 = scmp.eq.s32.totalorder %s20, 0
      %p211 = por %p209, %p210
      %p212 = scmp.ne.s32.totalorder %s198, %s199
      %p213 = scmp.eq.s32.totalorder %s21, 2
      %p214 = por %p212, %p213
      %p216 = scmp.ne.s32.totalorder %s199, %s215
      %p217 = scmp.eq.s32.totalorder %s21, 0
      %p218 = por %p216, %p217
      %p219 = scmp.le.s32.totalorder 1, %s15
      %p220 = scmp.lt.s32.totalorder %s15, 4
      %p221 = pnand %p219, %p220
      %p222 = pneg %p221
      // Predicated region
      $region9: #{tpu_custom_call.1} parent=5 // pred_check
        _
      $region10: #{tpu_custom_call.1} parent=5 // pred_check_branch
        %224 = sbr.rel (%p221) target = $region12
      $region11: #{tpu_custom_call.1} parent=5 // pred_region
        %s225 = ssub.s32 %s15, 1
        // Predicated region
        $region13: #{tpu_custom_call.1} parent=11 // pred_check
          %p226 = pneg %p53
        $region14: #{tpu_custom_call.1} parent=11 // pred_check_branch
          %228 = sbr.rel (%p226) target = $region16
        $region15: #{tpu_custom_call.1} parent=11 // pred_region
          %s229 = smul.u32 8, %s25
          %p230 = scmp.lt.s32.totalorder %s229, 7
          %s231 = scalar_select %p230, %s229, 7
          %s232 = scalar_lea.vmem %s0, %s231
          %s233 = smul.u32 8, %s25
        $region16: #{tpu_custom_call.1} parent=11 // pred_fallthru
          _
      $region12: #{tpu_custom_call.1} parent=5 // pred_fallthru
        _
      %p234 = scmp.lt.s32.totalorder %s15, 3
      // Predicated region
      $region17: #{tpu_custom_call.1} parent=5 // pred_check
        %p235 = pneg %p234
      $region18: #{tpu_custom_call.1} parent=5 // pred_check_branch
        %237 = sbr.rel (%p235) target = $region20
      $region19: #{tpu_custom_call.1} parent=5 // pred_region
        // Predicated region
        $region21: #{tpu_custom_call.1} parent=19 // pred_check
          %p238 = pneg %p75
        $region22: #{tpu_custom_call.1} parent=19 // pred_check_branch
          %240 = sbr.rel (%p238) target = $region24
        $region23: #{tpu_custom_call.1} parent=19 // pred_region
          %s241 = smul.u32 128, %s23
          %p242 = scmp.lt.s32.totalorder %s22, 2
          %s243 = scalar_select %p242, %s22, 2
          %p244 = scmp.lt.s32.totalorder %s241, 127
          %s245 = scalar_select %p244, %s241, 127
          %s246 = smul.addr %s243, 128
          %s247 = sadd.s32 %s245, %s246
          %s248 = smul.addr %s247, 4
          %s249 = scalar_lea.vmem %s1, %s248
          %s250 = smul.u32 128, %s23
        $region24: #{tpu_custom_call.1} parent=19 // pred_fallthru
          _
        // Predicated region
        $region25: #{tpu_custom_call.1} parent=19 // pred_check
          %p251 = pneg %p101
        $region26: #{tpu_custom_call.1} parent=19 // pred_check_branch
          %253 = sbr.rel (%p251) target = $region28
        $region27: #{tpu_custom_call.1} parent=19 // pred_region
          %p254 = scmp.lt.s32.totalorder %s22, 2
          %s255 = scalar_select %p254, %s22, 2
          %s256 = scalar_lea.vmem %s2, %s255
        $region28: #{tpu_custom_call.1} parent=19 // pred_fallthru
          _
        // Predicated region
        $region29: #{tpu_custom_call.1} parent=19 // pred_check
          %p257 = pneg %p127
        $region30: #{tpu_custom_call.1} parent=19 // pred_check_branch
          %259 = sbr.rel (%p257) target = $region32
        $region31: #{tpu_custom_call.1} parent=19 // pred_region
          %p260 = scmp.lt.s32.totalorder %s22, 2
          %s261 = scalar_select %p260, %s22, 2
          %s262 = smul.addr %s261, 4
          %s263 = smul.addr %s262, 8
          %s264 = scalar_lea.vmem %s3, %s263
        $region32: #{tpu_custom_call.1} parent=19 // pred_fallthru
          _
        // Predicated region
        $region33: #{tpu_custom_call.1} parent=19 // pred_check
          %p265 = pneg %p153
        $region34: #{tpu_custom_call.1} parent=19 // pred_check_branch
          %267 = sbr.rel (%p265) target = $region36
        $region35: #{tpu_custom_call.1} parent=19 // pred_region
          %p268 = scmp.lt.s32.totalorder %s22, 2
          %s269 = scalar_select %p268, %s22, 2
          %s270 = scalar_lea.vmem %s4, %s269
        $region36: #{tpu_custom_call.1} parent=19 // pred_fallthru
          _
        // Predicated region
        $region37: #{tpu_custom_call.1} parent=19 // pred_check
          %p271 = pneg %p179
        $region38: #{tpu_custom_call.1} parent=19 // pred_check_branch
          %273 = sbr.rel (%p271) target = $region40
        $region39: #{tpu_custom_call.1} parent=19 // pred_region
          %p274 = scmp.lt.s32.totalorder %s22, 2
          %s275 = scalar_select %p274, %s22, 2
          %s276 = smul.addr %s275, 2
          %s277 = scalar_lea.vmem %s5, %s276
        $region40: #{tpu_custom_call.1} parent=19 // pred_fallthru
          _
      $region20: #{tpu_custom_call.1} parent=5 // pred_fallthru
        _
      %p278 = scmp.le.s32.totalorder 1, %s15
      %p279 = scmp.lt.s32.totalorder %s15, 4
      %p280 = pnand %p278, %p279
      %p281 = pneg %p280
      // Predicated region
      $region41: #{tpu_custom_call.1} parent=5 // pred_check
        _
      $region42: #{tpu_custom_call.1} parent=5 // pred_check_branch
        %283 = sbr.rel (%p280) target = $region44
      $region43: #{tpu_custom_call.1} parent=5 // pred_region
        %s284 = ssub.s32 %s15, 1
        %s285 = smul.u32 8, %s25
        %p286 = scmp.lt.s32.totalorder %s285, 7
        %s287 = scalar_select %p286, %s285, 7
        %s288 = scalar_lea.vmem %s0, %s287
        %p289 = pneg %p53
        %p290 = pneg %p50
        %s291 = smul.u32 128, %s25
        %p292 = scmp.lt.s32.totalorder %s24, 2
        %s293 = scalar_select %p292, %s24, 2
        %p294 = scmp.lt.s32.totalorder %s291, 127
        %s295 = scalar_select %p294, %s291, 127
        %s296 = smul.addr %s293, 128
        %s297 = sadd.s32 %s295, %s296
        %s298 = smul.addr %s297, 4
        %s299 = scalar_lea.vmem %s1, %s298
        %p300 = pneg %p81
        %p301 = pneg %p78
        %p302 = scmp.lt.s32.totalorder %s24, 2
        %s303 = scalar_select %p302, %s24, 2
        %s304 = scalar_lea.vmem %s2, %s303
        %p305 = pneg %p107
        %p306 = pneg %p104
        %p307 = scmp.lt.s32.totalorder %s24, 2
        %s308 = scalar_select %p307, %s24, 2
        %s309 = smul.addr %s308, 4
        %s310 = smul.addr %s309, 8
        %s311 = scalar_lea.vmem %s3, %s310
        %p312 = pneg %p133
        %p313 = pneg %p130
        %p314 = scmp.lt.s32.totalorder %s24, 2
        %s315 = scalar_select %p314, %s24, 2
        %s316 = scalar_lea.vmem %s4, %s315
        %p317 = pneg %p159
        %p318 = pneg %p156
        %p319 = scmp.lt.s32.totalorder %s24, 2
        %s320 = scalar_select %p319, %s24, 2
        %s321 = smul.addr %s320, 2
        %s322 = scalar_lea.vmem %s5, %s321
        %p323 = pneg %p185
        %p324 = pneg %p182
        %p325 = pneg %p211
        %p326 = pneg %p208
        %s327 = sand.u32 %s198, 1
        %s328 = scalar_lea.sflag [#allocation4], %s327
        %s329 = sand.u32 %s198, 1
        %s330 = smul.addr %s329, 2
        %s331 = scalar_lea.vmem [#allocation3], %s330
        %s332 = smul.u32 8, %s25
        %p333 = scmp.lt.s32.totalorder %s332, 7
        %s334 = scalar_select %p333, %s332, 7
        %s335 = scalar_lea.vmem %s0, %s334
        %s336 = smul.u32 8, %s25
        %s337 = smul.u32 128, %s25
        %p338 = scmp.lt.s32.totalorder %s24, 2
        %s339 = scalar_select %p338, %s24, 2
        %p340 = scmp.lt.s32.totalorder %s337, 127
        %s341 = scalar_select %p340, %s337, 127
        %s342 = smul.addr %s339, 128
        %s343 = sadd.s32 %s341, %s342
        %s344 = smul.addr %s343, 4
        %s345 = scalar_lea.vmem %s1, %s344
        %s346 = smul.u32 128, %s25
        %p347 = scmp.lt.s32.totalorder %s24, 2
        %s348 = scalar_select %p347, %s24, 2
        %s349 = scalar_lea.vmem %s2, %s348
        %p350 = scmp.lt.s32.totalorder %s24, 2
        %s351 = scalar_select %p350, %s24, 2
        %s352 = smul.addr %s351, 4
        %s353 = smul.addr %s352, 8
        %s354 = scalar_lea.vmem %s3, %s353
        %p355 = scmp.lt.s32.totalorder %s24, 2
        %s356 = scalar_select %p355, %s24, 2
        %s357 = scalar_lea.vmem %s4, %s356
        %p358 = scmp.lt.s32.totalorder %s24, 2
        %s359 = scalar_select %p358, %s24, 2
        %s360 = smul.addr %s359, 2
        %s361 = scalar_lea.vmem %s5, %s360
        %p363 = scmp.eq.s32.totalorder %s25, 0
        // Predicated region
        $region45: #{tpu_custom_call.1} parent=43 // pred_check
          %p364 = pneg %p363
        $region46: #{tpu_custom_call.1} parent=43 // pred_check_branch
          %366 = sbr.rel (%p364) target = $region48
        $region47: #{tpu_custom_call.1} parent=43 // pred_region
          %vm367 = vcmask 254976
          %368 = vst.msk [vmem:[#allocation2] sm:$0x3] %vm367, 0.0
        $region48: #{tpu_custom_call.1} parent=43 // pred_fallthru
          _
        %v369 = vld [vmem:[#allocation2] sm:$0x3]
        %v370 = vld [vmem:[%s335] sm:$0xff]
        %v371 = vld [vmem:[%s345] sm:$0xf]
        %v372 = vld [vmem:[%s345 + $0x4] sm:$0xf]
        %v373 = vld [vmem:[%s345 + $0x8] sm:$0xf]
        %v374 = vld [vmem:[%s345 + $0xc] sm:$0xf]
        %v375 = vld [vmem:[%s345 + $0x10] sm:$0xf]
        %v376 = vld [vmem:[%s345 + $0x14] sm:$0xf]
        %v377 = vld [vmem:[%s345 + $0x18] sm:$0xf]
        %v378 = vld [vmem:[%s345 + $0x1c] sm:$0xf]
        %v379 = vld [vmem:[%s345 + $0x20] sm:$0xf]
        %v380 = vld [vmem:[%s345 + $0x24] sm:$0xf]
        %v381 = vld [vmem:[%s345 + $0x28] sm:$0xf]
        %v382 = vld [vmem:[%s345 + $0x2c] sm:$0xf]
        %v383 = vld [vmem:[%s345 + $0x30] sm:$0xf]
        %v384 = vld [vmem:[%s345 + $0x34] sm:$0xf]
        %v385 = vld [vmem:[%s345 + $0x38] sm:$0xf]
        %v386 = vld [vmem:[%s345 + $0x3c] sm:$0xf]
        %v387 = vld [vmem:[%s345 + $0x40] sm:$0xf]
        %v388 = vld [vmem:[%s345 + $0x44] sm:$0xf]
        %v389 = vld [vmem:[%s345 + $0x48] sm:$0xf]
        %v390 = vld [vmem:[%s345 + $0x4c] sm:$0xf]
        %v391 = vld [vmem:[%s345 + $0x50] sm:$0xf]
        %v392 = vld [vmem:[%s345 + $0x54] sm:$0xf]
        %v393 = vld [vmem:[%s345 + $0x58] sm:$0xf]
        %v394 = vld [vmem:[%s345 + $0x5c] sm:$0xf]
        %v395 = vld [vmem:[%s345 + $0x60] sm:$0xf]
        %v396 = vld [vmem:[%s345 + $0x64] sm:$0xf]
        %v397 = vld [vmem:[%s345 + $0x68] sm:$0xf]
        %v398 = vld [vmem:[%s345 + $0x6c] sm:$0xf]
        %v399 = vld [vmem:[%s345 + $0x70] sm:$0xf]
        %v400 = vld [vmem:[%s345 + $0x74] sm:$0xf]
        %v401 = vld [vmem:[%s345 + $0x78] sm:$0xf]
        %v402 = vld [vmem:[%s345 + $0x7c] sm:$0xf]
        %v403 = vld [vmem:[%s345 + $0x80] sm:$0xf]
        %v404 = vld [vmem:[%s345 + $0x84] sm:$0xf]
        %v405 = vld [vmem:[%s345 + $0x88] sm:$0xf]
        %v406 = vld [vmem:[%s345 + $0x8c] sm:$0xf]
        %v407 = vld [vmem:[%s345 + $0x90] sm:$0xf]
        %v408 = vld [vmem:[%s345 + $0x94] sm:$0xf]
        %v409 = vld [vmem:[%s345 + $0x98] sm:$0xf]
        %v410 = vld [vmem:[%s345 + $0x9c] sm:$0xf]
        %v411 = vld [vmem:[%s345 + $0xa0] sm:$0xf]
        %v412 = vld [vmem:[%s345 + $0xa4] sm:$0xf]
        %v413 = vld [vmem:[%s345 + $0xa8] sm:$0xf]
        %v414 = vld [vmem:[%s345 + $0xac] sm:$0xf]
        %v415 = vld [vmem:[%s345 + $0xb0] sm:$0xf]
        %v416 = vld [vmem:[%s345 + $0xb4] sm:$0xf]
        %v417 = vld [vmem:[%s345 + $0xb8] sm:$0xf]
        %v418 = vld [vmem:[%s345 + $0xbc] sm:$0xf]
        %v419 = vld [vmem:[%s345 + $0xc0] sm:$0xf]
        %v420 = vld [vmem:[%s345 + $0xc4] sm:$0xf]
        %v421 = vld [vmem:[%s345 + $0xc8] sm:$0xf]
        %v422 = vld [vmem:[%s345 + $0xcc] sm:$0xf]
        %v423 = vld [vmem:[%s345 + $0xd0] sm:$0xf]
        %v424 = vld [vmem:[%s345 + $0xd4] sm:$0xf]
        %v425 = vld [vmem:[%s345 + $0xd8] sm:$0xf]
        %v426 = vld [vmem:[%s345 + $0xdc] sm:$0xf]
        %v427 = vld [vmem:[%s345 + $0xe0] sm:$0xf]
        %v428 = vld [vmem:[%s345 + $0xe4] sm:$0xf]
        %v429 = vld [vmem:[%s345 + $0xe8] sm:$0xf]
        %v430 = vld [vmem:[%s345 + $0xec] sm:$0xf]
        %v431 = vld [vmem:[%s345 + $0xf0] sm:$0xf]
        %v432 = vld [vmem:[%s345 + $0xf4] sm:$0xf]
        %v433 = vld [vmem:[%s345 + $0xf8] sm:$0xf]
        %v434 = vld [vmem:[%s345 + $0xfc] sm:$0xf]
        %v435 = vld [vmem:[%s345 + $0x100] sm:$0xf]
        %v436 = vld [vmem:[%s345 + $0x104] sm:$0xf]
        %v437 = vld [vmem:[%s345 + $0x108] sm:$0xf]
        %v438 = vld [vmem:[%s345 + $0x10c] sm:$0xf]
        %v439 = vld [vmem:[%s345 + $0x110] sm:$0xf]
        %v440 = vld [vmem:[%s345 + $0x114] sm:$0xf]
        %v441 = vld [vmem:[%s345 + $0x118] sm:$0xf]
        %v442 = vld [vmem:[%s345 + $0x11c] sm:$0xf]
        %v443 = vld [vmem:[%s345 + $0x120] sm:$0xf]
        %v444 = vld [vmem:[%s345 + $0x124] sm:$0xf]
        %v445 = vld [vmem:[%s345 + $0x128] sm:$0xf]
        %v446 = vld [vmem:[%s345 + $0x12c] sm:$0xf]
        %v447 = vld [vmem:[%s345 + $0x130] sm:$0xf]
        %v448 = vld [vmem:[%s345 + $0x134] sm:$0xf]
        %v449 = vld [vmem:[%s345 + $0x138] sm:$0xf]
        %v450 = vld [vmem:[%s345 + $0x13c] sm:$0xf]
        %v451 = vld [vmem:[%s345 + $0x140] sm:$0xf]
        %v452 = vld [vmem:[%s345 + $0x144] sm:$0xf]
        %v453 = vld [vmem:[%s345 + $0x148] sm:$0xf]
        %v454 = vld [vmem:[%s345 + $0x14c] sm:$0xf]
        %v455 = vld [vmem:[%s345 + $0x150] sm:$0xf]
        %v456 = vld [vmem:[%s345 + $0x154] sm:$0xf]
        %v457 = vld [vmem:[%s345 + $0x158] sm:$0xf]
        %v458 = vld [vmem:[%s345 + $0x15c] sm:$0xf]
        %v459 = vld [vmem:[%s345 + $0x160] sm:$0xf]
        %v460 = vld [vmem:[%s345 + $0x164] sm:$0xf]
        %v461 = vld [vmem:[%s345 + $0x168] sm:$0xf]
        %v462 = vld [vmem:[%s345 + $0x16c] sm:$0xf]
        %v463 = vld [vmem:[%s345 + $0x170] sm:$0xf]
        %v464 = vld [vmem:[%s345 + $0x174] sm:$0xf]
        %v465 = vld [vmem:[%s345 + $0x178] sm:$0xf]
        %v466 = vld [vmem:[%s345 + $0x17c] sm:$0xf]
        %v467 = vld [vmem:[%s345 + $0x180] sm:$0xf]
        %v468 = vld [vmem:[%s345 + $0x184] sm:$0xf]
        %v469 = vld [vmem:[%s345 + $0x188] sm:$0xf]
        %v470 = vld [vmem:[%s345 + $0x18c] sm:$0xf]
        %v471 = vld [vmem:[%s345 + $0x190] sm:$0xf]
        %v472 = vld [vmem:[%s345 + $0x194] sm:$0xf]
        %v473 = vld [vmem:[%s345 + $0x198] sm:$0xf]
        %v474 = vld [vmem:[%s345 + $0x19c] sm:$0xf]
        %v475 = vld [vmem:[%s345 + $0x1a0] sm:$0xf]
        %v476 = vld [vmem:[%s345 + $0x1a4] sm:$0xf]
        %v477 = vld [vmem:[%s345 + $0x1a8] sm:$0xf]
        %v478 = vld [vmem:[%s345 + $0x1ac] sm:$0xf]
        %v479 = vld [vmem:[%s345 + $0x1b0] sm:$0xf]
        %v480 = vld [vmem:[%s345 + $0x1b4] sm:$0xf]
        %v481 = vld [vmem:[%s345 + $0x1b8] sm:$0xf]
        %v482 = vld [vmem:[%s345 + $0x1bc] sm:$0xf]
        %v483 = vld [vmem:[%s345 + $0x1c0] sm:$0xf]
        %v484 = vld [vmem:[%s345 + $0x1c4] sm:$0xf]
        %v485 = vld [vmem:[%s345 + $0x1c8] sm:$0xf]
        %v486 = vld [vmem:[%s345 + $0x1cc] sm:$0xf]
        %v487 = vld [vmem:[%s345 + $0x1d0] sm:$0xf]
        %v488 = vld [vmem:[%s345 + $0x1d4] sm:$0xf]
        %v489 = vld [vmem:[%s345 + $0x1d8] sm:$0xf]
        %v490 = vld [vmem:[%s345 + $0x1dc] sm:$0xf]
        %v491 = vld [vmem:[%s345 + $0x1e0] sm:$0xf]
        %v492 = vld [vmem:[%s345 + $0x1e4] sm:$0xf]
        %v493 = vld [vmem:[%s345 + $0x1e8] sm:$0xf]
        %v494 = vld [vmem:[%s345 + $0x1ec] sm:$0xf]
        %v495 = vld [vmem:[%s345 + $0x1f0] sm:$0xf]
        %v496 = vld [vmem:[%s345 + $0x1f4] sm:$0xf]
        %v497 = vld [vmem:[%s345 + $0x1f8] sm:$0xf]
        %v498 = vld [vmem:[%s345 + $0x1fc] sm:$0xf]
        %v500 = vcombine.high %v370, %v370
        %v502 = vunpack.c.l.s4 1966171168
        %v503 = vunpack.c.0.s8 %v502
        %v504 = vlaneseq
        %v505 = vshrl.u32 %v504, 7
        %v506 = vsub.s32 %v503, %v505
        %v507 = vrot.slane %v370, %v506
        %v509 = vunpack.c.l.s4 1966171168
        %v510 = vunpack.c.0.s8 %v509
        %v511 = vlaneseq
        %v512 = vshrl.u32 %v511, 7
        %v513 = vsub.s32 %v510, %v512
        %v514 = vrot.slane %v500, %v513
        %v515 = vcombine.high %v507, %v507
        %v516 = vcombine.high %v514, %v514
        %v518 = vunpack.c.l.s4 1966171168
        %v519 = vunpack.c.0.s8 %v518
        %v520 = vlaneseq
        %v521 = vshrl.u32 %v520, 7
        %v522 = vsub.s32 %v519, %v521
        %v523 = vrot.slane %v507, %v522
        %v525 = vunpack.c.l.s4 1966171168
        %v526 = vunpack.c.0.s8 %v525
        %v527 = vlaneseq
        %v528 = vshrl.u32 %v527, 7
        %v529 = vsub.s32 %v526, %v528
        %v530 = vrot.slane %v514, %v529
        %v532 = vunpack.c.l.s4 1966171168
        %v533 = vunpack.c.0.s8 %v532
        %v534 = vlaneseq
        %v535 = vshrl.u32 %v534, 7
        %v536 = vsub.s32 %v533, %v535
        %v537 = vrot.slane %v515, %v536
        %v539 = vunpack.c.l.s4 1966171168
        %v540 = vunpack.c.0.s8 %v539
        %v541 = vlaneseq
        %v542 = vshrl.u32 %v541, 7
        %v543 = vsub.s32 %v540, %v542
        %v544 = vrot.slane %v516, %v543
        %v545 = vcombine.high %v523, %v523
        %v546 = vcombine.high %v530, %v530
        %v547 = vcombine.high %v537, %v537
        %v548 = vcombine.high %v544, %v544
        %v685 = vunpack.c.l.b16 %v371
        %v686 = vunpack.c.l.b16 %v372
        %v687 = vunpack.c.l.b16 %v373
        %v688 = vunpack.c.l.b16 %v374
        %v689 = vunpack.c.l.b16 %v375
        %v690 = vunpack.c.l.b16 %v376
        %v691 = vunpack.c.l.b16 %v377
        %v692 = vunpack.c.l.b16 %v378
        %v693 = vunpack.c.l.b16 %v379
        %v694 = vunpack.c.l.b16 %v380
        %v695 = vunpack.c.l.b16 %v381
        %v696 = vunpack.c.l.b16 %v382
        %v697 = vunpack.c.l.b16 %v383
        %v698 = vunpack.c.l.b16 %v384
        %v699 = vunpack.c.l.b16 %v385
        %v700 = vunpack.c.l.b16 %v386
        %v701 = vunpack.c.l.b16 %v387
        %v702 = vunpack.c.l.b16 %v388
        %v703 = vunpack.c.l.b16 %v389
        %v704 = vunpack.c.l.b16 %v390
        %v705 = vunpack.c.l.b16 %v391
        %v706 = vunpack.c.l.b16 %v392
        %v707 = vunpack.c.l.b16 %v393
        %v708 = vunpack.c.l.b16 %v394
        %v709 = vunpack.c.l.b16 %v395
        %v710 = vunpack.c.l.b16 %v396
        %v711 = vunpack.c.l.b16 %v397
        %v712 = vunpack.c.l.b16 %v398
        %v713 = vunpack.c.l.b16 %v399
        %v714 = vunpack.c.l.b16 %v400
        %v715 = vunpack.c.l.b16 %v401
        %v716 = vunpack.c.l.b16 %v402
        %v717 = vunpack.c.l.b16 %v403
        %v718 = vunpack.c.l.b16 %v404
        %v719 = vunpack.c.l.b16 %v405
        %v720 = vunpack.c.l.b16 %v406
        %v721 = vunpack.c.l.b16 %v407
        %v722 = vunpack.c.l.b16 %v408
        %v723 = vunpack.c.l.b16 %v409
        %v724 = vunpack.c.l.b16 %v410
        %v725 = vunpack.c.l.b16 %v411
        %v726 = vunpack.c.l.b16 %v412
        %v727 = vunpack.c.l.b16 %v413
        %v728 = vunpack.c.l.b16 %v414
        %v729 = vunpack.c.l.b16 %v415
        %v730 = vunpack.c.l.b16 %v416
        %v731 = vunpack.c.l.b16 %v417
        %v732 = vunpack.c.l.b16 %v418
        %v733 = vunpack.c.l.b16 %v419
        %v734 = vunpack.c.l.b16 %v420
        %v735 = vunpack.c.l.b16 %v421
        %v736 = vunpack.c.l.b16 %v422
        %v737 = vunpack.c.l.b16 %v423
        %v738 = vunpack.c.l.b16 %v424
        %v739 = vunpack.c.l.b16 %v425
        %v740 = vunpack.c.l.b16 %v426
        %v741 = vunpack.c.l.b16 %v427
        %v742 = vunpack.c.l.b16 %v428
        %v743 = vunpack.c.l.b16 %v429
        %v744 = vunpack.c.l.b16 %v430
        %v745 = vunpack.c.l.b16 %v431
        %v746 = vunpack.c.l.b16 %v432
        %v747 = vunpack.c.l.b16 %v433
        %v748 = vunpack.c.l.b16 %v434
        %v749 = vunpack.c.l.b16 %v435
        %v750 = vunpack.c.l.b16 %v436
        %v751 = vunpack.c.l.b16 %v437
        %v752 = vunpack.c.l.b16 %v438
        %v753 = vunpack.c.l.b16 %v439
        %v754 = vunpack.c.l.b16 %v440
        %v755 = vunpack.c.l.b16 %v441
        %v756 = vunpack.c.l.b16 %v442
        %v757 = vunpack.c.l.b16 %v443
        %v758 = vunpack.c.l.b16 %v444
        %v759 = vunpack.c.l.b16 %v445
        %v760 = vunpack.c.l.b16 %v446
        %v761 = vunpack.c.l.b16 %v447
        %v762 = vunpack.c.l.b16 %v448
        %v763 = vunpack.c.l.b16 %v449
        %v764 = vunpack.c.l.b16 %v450
        %v765 = vunpack.c.l.b16 %v451
        %v766 = vunpack.c.l.b16 %v452
        %v767 = vunpack.c.l.b16 %v453
        %v768 = vunpack.c.l.b16 %v454
        %v769 = vunpack.c.l.b16 %v455
        %v770 = vunpack.c.l.b16 %v456
        %v771 = vunpack.c.l.b16 %v457
        %v772 = vunpack.c.l.b16 %v458
        %v773 = vunpack.c.l.b16 %v459
        %v774 = vunpack.c.l.b16 %v460
        %v775 = vunpack.c.l.b16 %v461
        %v776 = vunpack.c.l.b16 %v462
        %v777 = vunpack.c.l.b16 %v463
        %v778 = vunpack.c.l.b16 %v464
        %v779 = vunpack.c.l.b16 %v465
        %v780 = vunpack.c.l.b16 %v466
        %v781 = vunpack.c.l.b16 %v467
        %v782 = vunpack.c.l.b16 %v468
        %v783 = vunpack.c.l.b16 %v469
        %v784 = vunpack.c.l.b16 %v470
        %v785 = vunpack.c.l.b16 %v471
        %v786 = vunpack.c.l.b16 %v472
        %v787 = vunpack.c.l.b16 %v473
        %v788 = vunpack.c.l.b16 %v474
        %v789 = vunpack.c.l.b16 %v475
        %v790 = vunpack.c.l.b16 %v476
        %v791 = vunpack.c.l.b16 %v477
        %v792 = vunpack.c.l.b16 %v478
        %v793 = vunpack.c.l.b16 %v479
        %v794 = vunpack.c.l.b16 %v480
        %v795 = vunpack.c.l.b16 %v481
        %v796 = vunpack.c.l.b16 %v482
        %v797 = vunpack.c.l.b16 %v483
        %v798 = vunpack.c.l.b16 %v484
        %v799 = vunpack.c.l.b16 %v485
        %v800 = vunpack.c.l.b16 %v486
        %v801 = vunpack.c.l.b16 %v487
        %v802 = vunpack.c.l.b16 %v488
        %v803 = vunpack.c.l.b16 %v489
        %v804 = vunpack.c.l.b16 %v490
        %v805 = vunpack.c.l.b16 %v491
        %v806 = vunpack.c.l.b16 %v492
        %v807 = vunpack.c.l.b16 %v493
        %v808 = vunpack.c.l.b16 %v494
        %v809 = vunpack.c.l.b16 %v495
        %v810 = vunpack.c.l.b16 %v496
        %v811 = vunpack.c.l.b16 %v497
        %v812 = vunpack.c.l.b16 %v498
        %v813 = vpack.c.b16 %v686, %v685
        %v814 = vpack.c.b16 %v688, %v687
        %v815 = vpack.c.b16 %v690, %v689
        %v816 = vpack.c.b16 %v692, %v691
        %v817 = vpack.c.b16 %v694, %v693
        %v818 = vpack.c.b16 %v696, %v695
        %v819 = vpack.c.b16 %v698, %v697
        %v820 = vpack.c.b16 %v700, %v699
        %v821 = vpack.c.b16 %v702, %v701
        %v822 = vpack.c.b16 %v704, %v703
        %v823 = vpack.c.b16 %v706, %v705
        %v824 = vpack.c.b16 %v708, %v707
        %v825 = vpack.c.b16 %v710, %v709
        %v826 = vpack.c.b16 %v712, %v711
        %v827 = vpack.c.b16 %v714, %v713
        %v828 = vpack.c.b16 %v716, %v715
        %v829 = vpack.c.b16 %v718, %v717
        %v830 = vpack.c.b16 %v720, %v719
        %v831 = vpack.c.b16 %v722, %v721
        %v832 = vpack.c.b16 %v724, %v723
        %v833 = vpack.c.b16 %v726, %v725
        %v834 = vpack.c.b16 %v728, %v727
        %v835 = vpack.c.b16 %v730, %v729
        %v836 = vpack.c.b16 %v732, %v731
        %v837 = vpack.c.b16 %v734, %v733
        %v838 = vpack.c.b16 %v736, %v735
        %v839 = vpack.c.b16 %v738, %v737
        %v840 = vpack.c.b16 %v740, %v739
        %v841 = vpack.c.b16 %v742, %v741
        %v842 = vpack.c.b16 %v744, %v743
        %v843 = vpack.c.b16 %v746, %v745
        %v844 = vpack.c.b16 %v748, %v747
        %v845 = vpack.c.b16 %v750, %v749
        %v846 = vpack.c.b16 %v752, %v751
        %v847 = vpack.c.b16 %v754, %v753
        %v848 = vpack.c.b16 %v756, %v755
        %v849 = vpack.c.b16 %v758, %v757
        %v850 = vpack.c.b16 %v760, %v759
        %v851 = vpack.c.b16 %v762, %v761
        %v852 = vpack.c.b16 %v764, %v763
        %v853 = vpack.c.b16 %v766, %v765
        %v854 = vpack.c.b16 %v768, %v767
        %v855 = vpack.c.b16 %v770, %v769
        %v856 = vpack.c.b16 %v772, %v771
        %v857 = vpack.c.b16 %v774, %v773
        %v858 = vpack.c.b16 %v776, %v775
        %v859 = vpack.c.b16 %v778, %v777
        %v860 = vpack.c.b16 %v780, %v779
        %v861 = vpack.c.b16 %v782, %v781
        %v862 = vpack.c.b16 %v784, %v783
        %v863 = vpack.c.b16 %v786, %v785
        %v864 = vpack.c.b16 %v788, %v787
        %v865 = vpack.c.b16 %v790, %v789
        %v866 = vpack.c.b16 %v792, %v791
        %v867 = vpack.c.b16 %v794, %v793
        %v868 = vpack.c.b16 %v796, %v795
        %v869 = vpack.c.b16 %v798, %v797
        %v870 = vpack.c.b16 %v800, %v799
        %v871 = vpack.c.b16 %v802, %v801
        %v872 = vpack.c.b16 %v804, %v803
        %v873 = vpack.c.b16 %v806, %v805
        %v874 = vpack.c.b16 %v808, %v807
        %v875 = vpack.c.b16 %v810, %v809
        %v876 = vpack.c.b16 %v812, %v811
        %941 = vmatprep.subr.bf16.mxu0 0
        %942 = vmatpush1.bf16.msra.mxu0 %v813
        %943 = vmatprep.subr.bf16.mxu0 0
        %944 = vmatpush1.bf16.msra.mxu0 %v814
        %945 = vmatprep.subr.bf16.mxu0 0
        %946 = vmatpush1.bf16.msra.mxu0 %v815
        %947 = vmatprep.subr.bf16.mxu0 0
        %948 = vmatpush1.bf16.msra.mxu0 %v816
        %949 = vmatprep.subr.bf16.mxu0 0
        %950 = vmatpush1.bf16.msra.mxu0 %v817
        %951 = vmatprep.subr.bf16.mxu0 0
        %952 = vmatpush1.bf16.msra.mxu0 %v818
        %953 = vmatprep.subr.bf16.mxu0 0
        %954 = vmatpush1.bf16.msra.mxu0 %v819
        %955 = vmatprep.subr.bf16.mxu0 0
        %956 = vmatpush1.bf16.msra.mxu0 %v820
        %957 = vmatprep.subr.bf16.mxu0 0
        %958 = vmatpush1.bf16.msra.mxu0 %v821
        %959 = vmatprep.subr.bf16.mxu0 0
        %960 = vmatpush1.bf16.msra.mxu0 %v822
        %961 = vmatprep.subr.bf16.mxu0 0
        %962 = vmatpush1.bf16.msra.mxu0 %v823
        %963 = vmatprep.subr.bf16.mxu0 0
        %964 = vmatpush1.bf16.msra.mxu0 %v824
        %965 = vmatprep.subr.bf16.mxu0 0
        %966 = vmatpush1.bf16.msra.mxu0 %v825
        %967 = vmatprep.subr.bf16.mxu0 0
        %968 = vmatpush1.bf16.msra.mxu0 %v826
        %969 = vmatprep.subr.bf16.mxu0 0
        %970 = vmatpush1.bf16.msra.mxu0 %v827
        %971 = vmatprep.subr.bf16.mxu0 0
        %972 = vmatpush1.bf16.msra.mxu0 %v828
        %973 = vmatprep.mubr.bf16.mxu0 %v537
        %974 = vmatmul.mubr.bf16.gmra.mrb[0].mxu0 %v523
        %v975 = vpop.f32.mrb[0].mxu0
        %v976 = vadd.f32 0.0, %v975
        %v977 = vpop.f32.mrb[0].mxu0
        %v978 = vpop.f32.mrb[0].mxu0
        %v979 = vpop.f32.mrb[0].mxu0
        %980 = vdwg.mxu0
        %981 = vmatprep.subr.bf16.mxu0 0
        %982 = vmatpush1.bf16.msra.mxu0 %v829
        %983 = vmatprep.subr.bf16.mxu0 0
        %984 = vmatpush1.bf16.msra.mxu0 %v830
        %985 = vmatprep.subr.bf16.mxu0 0
        %986 = vmatpush1.bf16.msra.mxu0 %v831
        %987 = vmatprep.subr.bf16.mxu0 0
        %988 = vmatpush1.bf16.msra.mxu0 %v832
        %989 = vmatprep.subr.bf16.mxu0 0
        %990 = vmatpush1.bf16.msra.mxu0 %v833
        %991 = vmatprep.subr.bf16.mxu0 0
        %992 = vmatpush1.bf16.msra.mxu0 %v834
        %993 = vmatprep.subr.bf16.mxu0 0
        %994 = vmatpush1.bf16.msra.mxu0 %v835
        %995 = vmatprep.subr.bf16.mxu0 0
        %996 = vmatpush1.bf16.msra.mxu0 %v836
        %997 = vmatprep.subr.bf16.mxu0 0
        %998 = vmatpush1.bf16.msra.mxu0 %v837
        %999 = vmatprep.subr.bf16.mxu0 0
        %1000 = vmatpush1.bf16.msra.mxu0 %v838
        %1001 = vmatprep.subr.bf16.mxu0 0
        %1002 = vmatpush1.bf16.msra.mxu0 %v839
        %1003 = vmatprep.subr.bf16.mxu0 0
        %1004 = vmatpush1.bf16.msra.mxu0 %v840
        %1005 = vmatprep.subr.bf16.mxu0 0
        %1006 = vmatpush1.bf16.msra.mxu0 %v841
        %1007 = vmatprep.subr.bf16.mxu0 0
        %1008 = vmatpush1.bf16.msra.mxu0 %v842
        %1009 = vmatprep.subr.bf16.mxu0 0
        %1010 = vmatpush1.bf16.msra.mxu0 %v843
        %1011 = vmatprep.subr.bf16.mxu0 0
        %1012 = vmatpush1.bf16.msra.mxu0 %v844
        %1013 = vmatprep.mubr.bf16.mxu0 %v547
        %1014 = vmatmul.mubr.bf16.gmra.mrb[0].mxu0 %v545
        %v1015 = vpop.f32.mrb[0].mxu0
        %v1016 = vadd.f32 %v976, %v1015
        %v1017 = vpop.f32.mrb[0].mxu0
        %v1018 = vpop.f32.mrb[0].mxu0
        %v1019 = vpop.f32.mrb[0].mxu0
        %1020 = vdwg.mxu0
        %1021 = vmatprep.subr.bf16.mxu0 0
        %1022 = vmatpush1.bf16.msra.mxu0 %v845
        %1023 = vmatprep.subr.bf16.mxu0 0
        %1024 = vmatpush1.bf16.msra.mxu0 %v846
        %1025 = vmatprep.subr.bf16.mxu0 0
        %1026 = vmatpush1.bf16.msra.mxu0 %v847
        %1027 = vmatprep.subr.bf16.mxu0 0
        %1028 = vmatpush1.bf16.msra.mxu0 %v848
        %1029 = vmatprep.subr.bf16.mxu0 0
        %1030 = vmatpush1.bf16.msra.mxu0 %v849
        %1031 = vmatprep.subr.bf16.mxu0 0
        %1032 = vmatpush1.bf16.msra.mxu0 %v850
        %1033 = vmatprep.subr.bf16.mxu0 0
        %1034 = vmatpush1.bf16.msra.mxu0 %v851
        %1035 = vmatprep.subr.bf16.mxu0 0
        %1036 = vmatpush1.bf16.msra.mxu0 %v852
        %1037 = vmatprep.subr.bf16.mxu0 0
        %1038 = vmatpush1.bf16.msra.mxu0 %v853
        %1039 = vmatprep.subr.bf16.mxu0 0
        %1040 = vmatpush1.bf16.msra.mxu0 %v854
        %1041 = vmatprep.subr.bf16.mxu0 0
        %1042 = vmatpush1.bf16.msra.mxu0 %v855
        %1043 = vmatprep.subr.bf16.mxu0 0
        %1044 = vmatpush1.bf16.msra.mxu0 %v856
        %1045 = vmatprep.subr.bf16.mxu0 0
        %1046 = vmatpush1.bf16.msra.mxu0 %v857
        %1047 = vmatprep.subr.bf16.mxu0 0
        %1048 = vmatpush1.bf16.msra.mxu0 %v858
        %1049 = vmatprep.subr.bf16.mxu0 0
        %1050 = vmatpush1.bf16.msra.mxu0 %v859
        %1051 = vmatprep.subr.bf16.mxu0 0
        %1052 = vmatpush1.bf16.msra.mxu0 %v860
        %1053 = vmatprep.mubr.bf16.mxu0 %v544
        %1054 = vmatmul.mubr.bf16.gmra.mrb[0].mxu0 %v530
        %v1055 = vpop.f32.mrb[0].mxu0
        %v1056 = vadd.f32 %v1016, %v1055
        %v1057 = vpop.f32.mrb[0].mxu0
        %v1058 = vpop.f32.mrb[0].mxu0
        %v1059 = vpop.f32.mrb[0].mxu0
        %1060 = vdwg.mxu0
        %1061 = vmatprep.subr.bf16.mxu0 0
        %1062 = vmatpush1.bf16.msra.mxu0 %v861
        %1063 = vmatprep.subr.bf16.mxu0 0
        %1064 = vmatpush1.bf16.msra.mxu0 %v862
        %1065 = vmatprep.subr.bf16.mxu0 0
        %1066 = vmatpush1.bf16.msra.mxu0 %v863
        %1067 = vmatprep.subr.bf16.mxu0 0
        %1068 = vmatpush1.bf16.msra.mxu0 %v864
        %1069 = vmatprep.subr.bf16.mxu0 0
        %1070 = vmatpush1.bf16.msra.mxu0 %v865
        %1071 = vmatprep.subr.bf16.mxu0 0
        %1072 = vmatpush1.bf16.msra.mxu0 %v866
        %1073 = vmatprep.subr.bf16.mxu0 0
        %1074 = vmatpush1.bf16.msra.mxu0 %v867
        %1075 = vmatprep.subr.bf16.mxu0 0
        %1076 = vmatpush1.bf16.msra.mxu0 %v868
        %1077 = vmatprep.subr.bf16.mxu0 0
        %1078 = vmatpush1.bf16.msra.mxu0 %v869
        %1079 = vmatprep.subr.bf16.mxu0 0
        %1080 = vmatpush1.bf16.msra.mxu0 %v870
        %1081 = vmatprep.subr.bf16.mxu0 0
        %1082 = vmatpush1.bf16.msra.mxu0 %v871
        %1083 = vmatprep.subr.bf16.mxu0 0
        %1084 = vmatpush1.bf16.msra.mxu0 %v872
        %1085 = vmatprep.subr.bf16.mxu0 0
        %1086 = vmatpush1.bf16.msra.mxu0 %v873
        %1087 = vmatprep.subr.bf16.mxu0 0
        %1088 = vmatpush1.bf16.msra.mxu0 %v874
        %1089 = vmatprep.subr.bf16.mxu0 0
        %1090 = vmatpush1.bf16.msra.mxu0 %v875
        %1091 = vmatprep.subr.bf16.mxu0 0
        %1092 = vmatpush1.bf16.msra.mxu0 %v876
        %1093 = vmatprep.mubr.bf16.mxu0 %v548
        %1094 = vmatmul.mubr.bf16.gmra.mrb[0].mxu0 %v546
        %v1095 = vpop.f32.mrb[0].mxu0
        %v1096 = vadd.f32 %v1056, %v1095
        %v1097 = vpop.f32.mrb[0].mxu0
        %v1098 = vpop.f32.mrb[0].mxu0
        %v1099 = vpop.f32.mrb[0].mxu0
        %1100 = vdwg.mxu0
        %v1101 = vadd.f32 %v369, %v1096
        %vm1102 = vcmask 254976
        %1103 = vst.msk [vmem:[#allocation2] sm:$0x3] %vm1102, %v1101
        // Predicated region
        $region49: #{tpu_custom_call.1} parent=43 // pred_check
          %p1104 = pneg %p363
        $region50: #{tpu_custom_call.1} parent=43 // pred_check_branch
          %1106 = sbr.rel (%p1104) target = $region52
        $region51: #{tpu_custom_call.1} parent=43 // pred_region
          %v1107 = vld [vmem:[#allocation2] sm:$0x3]
          %v1108 = vld [vmem:[%s349] sm:$0x1]
          %v1110 = vlaneseq
          %v1111 = vshrl.u32 %v1110, 7
          %v1112 = vsub.s32 0, %v1111
          %v1113 = vrot.slane %v1108, %v1112
          %v1115 = vadd.f32 %v1107, %v1113
          %v1116 = vmax.f32 %v1115, 0.0
          %v1117 = vld [vmem:[%s354] sm:$0xff]
          %v1118 = vld [vmem:[%s354 + $0x8] sm:$0xff]
          %v1119 = vld [vmem:[%s354 + $0x10] sm:$0xff]
          %v1120 = vld [vmem:[%s354 + $0x18] sm:$0xff]
          %v1121 = vld [vmem:[%s357] sm:$0x1]
          %v1123 = vlaneseq
          %v1124 = vshrl.u32 %v1123, 7
          %v1125 = vsub.s32 0, %v1124
          %v1126 = vrot.slane %v1121, %v1125
          %vm1128 = vcmask 261120
          %v1130 = vsel %vm1128, %v1116, 0
          %1132 = vmatprep.subr.mxu0 0.0
          %1133 = vmatpush1.msra.mxu0 %v1117
          %1134 = vmatprep.subr.mxu0 0.0
          %1135 = vmatpush1.msra.mxu0 %v1118
          %1136 = vmatprep.subr.mxu0 0.0
          %1137 = vmatpush1.msra.mxu0 %v1119
          %1138 = vmatprep.subr.mxu0 0.0
          %1139 = vmatpush1.msra.mxu0 %v1120
          %1140 = vmatprep.subr.mxu0 0.0
          %1141 = vmatpush1.msra.mxu0 0.0
          %1142 = vmatprep.subr.mxu0 0.0
          %1143 = vmatpush1.msra.mxu0 0.0
          %1144 = vmatprep.subr.mxu0 0.0
          %1145 = vmatpush1.msra.mxu0 0.0
          %1146 = vmatprep.subr.mxu0 0.0
          %1147 = vmatpush1.msra.mxu0 0.0
          %1148 = vmatprep.subr.mxu0 0.0
          %1149 = vmatpush1.msra.mxu0 0.0
          %1150 = vmatprep.subr.mxu0 0.0
          %1151 = vmatpush1.msra.mxu0 0.0
          %1152 = vmatprep.subr.mxu0 0.0
          %1153 = vmatpush1.msra.mxu0 0.0
          %1154 = vmatprep.subr.mxu0 0.0
          %1155 = vmatpush1.msra.mxu0 0.0
          %1156 = vmatprep.subr.mxu0 0.0
          %1157 = vmatpush1.msra.mxu0 0.0
          %1158 = vmatprep.subr.mxu0 0.0
          %1159 = vmatpush1.msra.mxu0 0.0
          %1160 = vmatprep.subr.mxu0 0.0
          %1161 = vmatpush1.msra.mxu0 0.0
          %1162 = vmatprep.subr.mxu0 0.0
          %1163 = vmatpush1.msra.mxu0 0.0
          %1164 = vmatprep.subr.mxu0 0.0
          %1165 = vmatpush1.msra.mxu0 0.0
          %1166 = vmatprep.subr.mxu0 0.0
          %1167 = vmatpush1.msra.mxu0 0.0
          %1168 = vmatprep.subr.mxu0 0.0
          %1169 = vmatpush1.msra.mxu0 0.0
          %1170 = vmatprep.subr.mxu0 0.0
          %1171 = vmatpush1.msra.mxu0 0.0
          %1172 = vmatprep.subr.mxu0 0.0
          %1173 = vmatpush1.msra.mxu0 0.0
          %1174 = vmatprep.subr.mxu0 0.0
          %1175 = vmatpush1.msra.mxu0 0.0
          %1176 = vmatprep.subr.mxu0 0.0
          %1177 = vmatpush1.msra.mxu0 0.0
          %1178 = vmatprep.subr.mxu0 0.0
          %1179 = vmatpush1.msra.mxu0 0.0
          %1180 = vmatprep.subr.mxu0 0.0
          %1181 = vmatpush1.msra.mxu0 0.0
          %1182 = vmatprep.subr.mxu0 0.0
          %1183 = vmatpush1.msra.mxu0 0.0
          %1184 = vmatprep.subr.mxu0 0.0
          %1185 = vmatpush1.msra.mxu0 0.0
          %1186 = vmatprep.subr.mxu0 0.0
          %1187 = vmatpush1.msra.mxu0 0.0
          %1188 = vmatprep.subr.mxu0 0.0
          %1189 = vmatpush1.msra.mxu0 0.0
          %1190 = vmatprep.subr.mxu0 0.0
          %1191 = vmatpush1.msra.mxu0 0.0
          %1192 = vmatprep.subr.mxu0 0.0
          %1193 = vmatpush1.msra.mxu0 0.0
          %1194 = vmatprep.subr.mxu0 0.0
          %1195 = vmatpush1.msra.mxu0 0.0
          %1196 = vmatprep.mubr.f32.mxu0 0.0
          %1197 = vmatmul.mubr.f32.gmra.mrb[0].mxu0 %v1130
          %v1198 = vpop.f32.mrb[0].mxu0
          %v1199 = vadd.f32 %v1126, %v1198
          %v1200 = vpop.f32.mrb[0].mxu0
          %1201 = vdwg.mxu0
          %v1202 = vmax.f32 %v1199, 0.0
          %vm1203 = vcmp.ne.f32.partialorder %v1199, %v1199
          %v1204 = vadd.f32 %v1199, 0.0
          %v1205 = vand.u32 2147483647, %v1199
          %v1206 = vsub.f32 0.0, %v1205
          %v1207 = vmul.f32 %v1206, 1.442695
          %v1208 = vpow.pop %v1207
          %v1209 = vadd.f32 %v1208, 1.0
          %v1210 = vlog2.pop %v1209
          %v1211 = vmul.f32 %v1210, 0.6931472
          %v1212 = vmul.f32 -0.5, %v1208
          %v1213 = vadd.f32 %v1212, 1.0
          %v1214 = vmul.f32 %v1213, %v1208
          %v1215 = vand.u32 2147483647, %v1208
          %vm1216 = vcmp.lt.f32.partialorder %v1215, 0.0004427343
          %v1217 = vsel %vm1216, %v1214, %v1211
          %v1218 = vadd.f32 %v1202, %v1217
          %v1219 = vsel %vm1203, %v1204, %v1218
          %v1220 = vadd.f32 %v1219, 1e-06
          %v1221 = vld [vmem:[%s361] sm:$0x3]
          %1223 = vrot.lane.b32.xlu0 %v1221, 8
          %v1224 = vpop.permute.xlu0 %1223
          %v1226 = vmul.f32 %v1220, %v1224
          %1228 = vrot.lane.b32.xlu0 %v1226, 120
          %v1229 = vpop.permute.xlu0 %1228
          %v1231 = vadd.f32 %v1199, %v1229
          %vm1232 = vcmask 58368
          %1233 = vst.msk [vmem:[%s331] sm:$0x3] %vm1232, %v1199
          %vm1234 = vcmask 123968
          %1235 = vst.msk [vmem:[%s331] sm:$0x3] %vm1234, %v1220
          %1237 = vrot.lane.b32.xlu0 %v1231, 16
          %v1238 = vpop.permute.xlu0 %1237
          %vm1240 = vcmask 189568
          %1241 = vst.msk [vmem:[%s331] sm:$0x3] %vm1240, %v1238
        $region52: #{tpu_custom_call.1} parent=43 // pred_fallthru
          _
        %s1242 = sand.u32 %s198, 1
        %s1243 = scalar_lea.sflag [#allocation4], %s1242
        %s1244 = sand.u32 %s198, 1
        %s1245 = smul.addr %s1244, 2
        %s1246 = scalar_lea.vmem [#allocation3], %s1245
        // Predicated region
        $region53: #{tpu_custom_call.1} parent=43 // pred_check
          %p1247 = pneg %p208
        $region54: #{tpu_custom_call.1} parent=43 // pred_check_branch
          %1249 = sbr.rel (%p1247) target = $region56
        $region55: #{tpu_custom_call.1} parent=43 // pred_region
          %s1251 = ssub.s32 32, 32
          %1252 = vsyncadd %s1243, %s1251
          %s1253 = smul.addr %s24, 32
          %s1254 = scalar_lea.hbm %s6, %s1253
          %s1256 = sshll.u32 %s1246, 4
          %s1257 = int_to_ptr.vmem [resolvable:$true] %s1256
          %1259 = dma.vmem_to_hbm [thread:$0]  %s1257, 32, %s1254, %s1243
        $region56: #{tpu_custom_call.1} parent=43 // pred_fallthru
          _
      $region44: #{tpu_custom_call.1} parent=5 // pred_fallthru
        _
      %p1260 = scmp.le.s32.totalorder 2, %s15
      // Predicated region
      $region57: #{tpu_custom_call.1} parent=5 // pred_check
        %p1261 = pneg %p1260
      $region58: #{tpu_custom_call.1} parent=5 // pred_check_branch
        %1263 = sbr.rel (%p1261) target = $region60
      $region59: #{tpu_custom_call.1} parent=5 // pred_region
        %s1264 = ssub.s32 %s15, 2
        // Predicated region
        $region61: #{tpu_custom_call.1} parent=59 // pred_check
          %p1265 = pneg %p214
        $region62: #{tpu_custom_call.1} parent=59 // pred_check_branch
          %1267 = sbr.rel (%p1265) target = $region64
        $region63: #{tpu_custom_call.1} parent=59 // pred_region
          %s1268 = sand.u32 %s199, 1
          %s1269 = scalar_lea.sflag [#allocation4], %s1268
          %s1270 = sand.u32 %s199, 1
          %s1271 = smul.addr %s1270, 2
          %s1272 = scalar_lea.vmem [#allocation3], %s1271
          %1273 = dma.done %s1269, 32
        $region64: #{tpu_custom_call.1} parent=59 // pred_fallthru
          _
      $region60: #{tpu_custom_call.1} parent=5 // pred_fallthru
        _
    $region6: #{tpu_custom_call.1} parent=1 // loop_footer
      %s19 = sadd.s32 1, %s15
    $region7: #{tpu_custom_call.1} parent=1 // loop_footer_branch
      %14 = sbr.rel target = $region3
    $region8: #{tpu_custom_call.1} parent=1 // loop_exit
      _
    %1274 = vsyncpa [#allocation4], 1
    %s1275 = scalar_lea.sflag [#allocation4], 1
    %1276 = vsyncpa %s1275, 1

</llo_original>
